<compile_context>
chip_gen: v7x
topology: tpu7x:2x2x1
jax: 0.10.0
libtpu: 0.0.40
codegen_flags: <defaults>
</compile_context>

<pallas_src>
import functools

import jax
import jax.numpy as jnp
from jax.experimental import pallas as pl
from jax.experimental.pallas import tpu as pltpu

MFCC_DIM = 40
IVEC_DIM = 100
IN_DIM = 3 * MFCC_DIM + IVEC_DIM      # 220
OUT_DIM = 1536
BN_EPS = 0.001
VMEM_LIMIT = 32 * 1024 * 1024         # safe on v5e/v6e (128 MiB) and v7x (64 MiB)
FUSED_MAX_ROWS = 2048                 # up to here, all frames fit comfortably in VMEM


# ----------------------------------------------------------------------------
# Kernels
# ----------------------------------------------------------------------------
def _fused_kernel(x_ref, w_ref, b_ref, o_ref, *, inv_n):
    """Small-N single-pass path (all frames resident): matmul + ReLU + BN.

    x_ref : (N, Kp)   spliced+padded features (compute dtype)
    w_ref : (Kp, TN)  folded weight tile (compute dtype)
    b_ref : (1, TN)   folded bias (f32)
    o_ref : (N, TN)   normalized output (out dtype)
    """
    h = jnp.dot(x_ref[...], w_ref[...], preferred_element_type=jnp.float32)
    h = jnp.maximum(h + b_ref[...], 0.0)
    s = jnp.sum(h, axis=0, keepdims=True)
    ss = jnp.sum(h * h, axis=0, keepdims=True)
    mean = s * inv_n
    var = jnp.maximum(ss * inv_n - mean * mean, 0.0)   # clamp one-pass cancellation
    o_ref[...] = ((h - mean) * jax.lax.rsqrt(var + BN_EPS)).astype(o_ref.dtype)


def _stats_kernel(x_ref, w_ref, b_ref, s_ref, ss_ref, *, tm, n_valid, mask_rows):
    """Pass 1 of the tiled path: matmul + ReLU, accumulate per-channel sum/sumsq.

    Grid = (channel tiles [parallel], N tiles [arbitrary, innermost]).
    The h tile is never written to HBM.
    """
    i = pl.program_id(1)  # N-tile index (reduction axis for the BN stats)
    h = jnp.dot(x_ref[...], w_ref[...], preferred_element_type=jnp.float32)
    h = jnp.maximum(h + b_ref[...], 0.0)
    if mask_rows:  # zero padded frames so they don't contaminate the statistics
        row = i * tm + jax.lax.broadcasted_iota(jnp.int32, (tm, 1), 0)
        h = jnp.where(row < n_valid, h, 0.0)

    @pl.when(i == 0)
    def _():
        s_ref[...] = jnp.zeros_like(s_ref)
        ss_ref[...] = jnp.zeros_like(ss_ref)

    s_ref[...] += jnp.sum(h, axis=0, keepdims=True)
    ss_ref[...] += jnp.sum(h * h, axis=0, keepdims=True)


def _recompute_bn_kernel(x_ref, w_ref, b_ref, mean_ref, scale_ref, o_ref):
    """Pass 2 of the tiled path: recompute matmul + ReLU, apply normalization."""
    h = jnp.dot(x_ref[...], w_ref[...], preferred_element_type=jnp.float32)
    h = jnp.maximum(h + b_ref[...], 0.0)
    o_ref[...] = ((h - mean_ref[...]) * scale_ref[...]).astype(o_ref.dtype)


# ----------------------------------------------------------------------------
# pallas_call wrappers
# ----------------------------------------------------------------------------
def _fused_forward(x2, w, b, n_rows, d_in_p, d_out, tn, out_dtype):
    # NOTE: the constant-index x/bias blocks here are <= ~1 MiB, so the default
    # double-buffering is harmless; pipeline_mode=pl.Buffered(1) not needed.
    kernel = functools.partial(_fused_kernel, inv_n=1.0 / n_rows)
    return pl.pallas_call(
        kernel,
        out_shape=jax.ShapeDtypeStruct((n_rows, d_out), out_dtype),
        grid_spec=pltpu.PrefetchScalarGridSpec(
            num_scalar_prefetch=0,
            grid=(d_out // tn,),
            in_specs=[
                pl.BlockSpec((n_rows, d_in_p), lambda j: (0, 0)),   # x (full, resident)
                pl.BlockSpec((d_in_p, tn), lambda j: (0, j)),       # folded W tile
                pl.BlockSpec((1, tn), lambda j: (0, j)),            # folded bias tile
            ],
            out_specs=pl.BlockSpec((n_rows, tn), lambda j: (0, j)),
        ),
        compiler_params=pltpu.CompilerParams(
            dimension_semantics=("parallel",),        # 6 channel tiles -> even v7x split
            vmem_limit_bytes=VMEM_LIMIT,
        ),
    )(x2, w, b)


def _tiled_forward(x2, w, b, n_real, n_pad, d_in_p, d_out, tm, out_dtype):
    # Pass-1 channel tile: 768 -> 2 tiles (even across v7x's 2 TCs, only 2x
    # re-read of the small bf16 input).  Pass-2 channel tile: 512 (lane-dense
    # output blocks; both grid axes parallel so megacore splits along N).
    tn1 = 768 if d_out % 768 == 0 else (512 if d_out % 512 == 0 else d_out)
    tn2 = 512 if d_out % 512 == 0 else d_out
    tm1 = min(tm, 512)                 # keep pass-1 in-kernel temporaries modest
    n_c1, n_c2 = d_out // tn1, d_out // tn2
    n_n1, n_n2 = n_pad // tm1, n_pad // tm
    mask_rows = (n_pad != n_real)

    # ---- Pass 1: per-channel sum / sum-of-squares of relu(x @ W + b) ----
    stats_kernel = functools.partial(
        _stats_kernel, tm=tm1, n_valid=n_real, mask_rows=mask_rows)
    s, ss = pl.pallas_call(
        stats_kernel,
        out_shape=(
            jax.ShapeDtypeStruct((1, d_out), jnp.float32),
            jax.ShapeDtypeStruct((1, d_out), jnp.float32),
        ),
        grid_spec=pltpu.PrefetchScalarGridSpec(
            num_scalar_prefetch=0,
            grid=(n_c1, n_n1),
            in_specs=[
                pl.BlockSpec((tm1, d_in_p), lambda j, i: (i, 0)),   # x N-tile
                pl.BlockSpec((d_in_p, tn1), lambda j, i: (0, j)),   # W tile (resident over i)
                pl.BlockSpec((1, tn1), lambda j, i: (0, j)),        # bias tile
            ],
            out_specs=[
                pl.BlockSpec((1, tn1), lambda j, i: (0, j)),        # sum   (accumulator)
                pl.BlockSpec((1, tn1), lambda j, i: (0, j)),        # sumsq (accumulator)
            ],
        ),
        compiler_params=pltpu.CompilerParams(
            dimension_semantics=("parallel", "arbitrary"),
            vmem_limit_bytes=VMEM_LIMIT,
        ),
    )(x2, w, b)

    # Tiny per-channel reduction -> mean / inv-std (plain JAX, (1, 1536) arrays).
    inv_n = 1.0 / n_real
    mean = s * inv_n
    var = jnp.maximum(ss * inv_n - mean * mean, 0.0)   # clamp one-pass cancellation
    scale = jax.lax.rsqrt(var + BN_EPS)

    # ---- Pass 2: recompute matmul + ReLU, normalize, single HBM write ----
    return pl.pallas_call(
        _recompute_bn_kernel,
        out_shape=jax.ShapeDtypeStruct((n_pad, d_out), out_dtype),
        grid_spec=pltpu.PrefetchScalarGridSpec(
            num_scalar_prefetch=0,
            grid=(n_n2, n_c2),          # channel innermost -> x read once per row group
            in_specs=[
                pl.BlockSpec((tm, d_in_p), lambda i, j: (i, 0)),
                pl.BlockSpec((d_in_p, tn2), lambda i, j: (0, j)),
                pl.BlockSpec((1, tn2), lambda i, j: (0, j)),
                pl.BlockSpec((1, tn2), lambda i, j: (0, j)),
                pl.BlockSpec((1, tn2), lambda i, j: (0, j)),
            ],
            out_specs=pl.BlockSpec((tm, tn2), lambda i, j: (i, j)),
        ),
        compiler_params=pltpu.CompilerParams(
            dimension_semantics=("parallel", "parallel"),
            vmem_limit_bytes=VMEM_LIMIT,
        ),
    )(x2, w, b, mean, scale)


# ----------------------------------------------------------------------------
# Public API
# ----------------------------------------------------------------------------
def prepare_params(w_lda_t, b_lda, w_k_t, b_k, *, compute_dtype=jnp.bfloat16):
    """One-time prep: fold lda o kernel, pad K 220->256 (lane aligned), cast.

    Returns (w_p, b_comb) with w_p: (256, 1536) compute_dtype, b_comb: (1, 1536) f32.
    """
    w_comb = w_lda_t.astype(jnp.float32) @ w_k_t.astype(jnp.float32)            # (220, 1536)
    b_comb = (b_lda.astype(jnp.float32) @ w_k_t.astype(jnp.float32)
              + b_k.astype(jnp.float32)).reshape(1, -1)                         # (1, 1536)
    d_in = w_comb.shape[0]
    d_in_p = ((d_in + 127) // 128) * 128                                        # 256
    w_p = jnp.pad(w_comb, ((0, d_in_p - d_in), (0, 0))).astype(compute_dtype)
    return w_p, b_comb


def input_layer_forward(x, w_p, b_comb, *, out_dtype=jnp.float32):
    """x: (B, T, F) float32 with F >= 140 (first 40 feats = MFCC, last 100 = ivector).

    w_p / b_comb come from prepare_params(); compute dtype is inferred from w_p.
    """
    B, T, _ = x.shape
    d_in_p, d_out = w_p.shape
    compute_dtype = w_p.dtype
    N = B * T

    # --- glue: +/-1 frame context splice, K-pad and cast in one fused expr ---
    # TODO(synk): the splice could be assembled in-kernel from a resident MFCC
    # block with shifted pl.ds loads to avoid this extra pass over the input.
    mfccs = x[:, :, :MFCC_DIM]
    ivectors = x[:, :, -IVEC_DIM:]
    ctx_first = jnp.concatenate([mfccs[:, :1, :], mfccs[:, :-1, :]], axis=1)
    ctx_last = jnp.concatenate([mfccs[:, 1:, :], mfccs[:, -1:, :]], axis=1)
    kpad = jnp.zeros((B, T, d_in_p - IN_DIM), x.dtype)
    feats = jnp.concatenate([ctx_first, mfccs, ctx_last, ivectors, kpad], axis=2)
    x2 = feats.reshape(N, d_in_p).astype(compute_dtype)

    if N <= FUSED_MAX_ROWS:
        tn = 256 if d_out % 256 == 0 else d_out     # 6 channel tiles -> even v7x split
        out2 = _fused_forward(x2, w_p, b_comb, N, d_in_p, d_out, tn, out_dtype)
        return out2.reshape(B, T, d_out)

    # Large N: two-pass stats + recompute path, tiled over frames.
    tm = next((c for c in (2048, 1024, 512, 256) if N % c == 0), None)
    if tm is None:
        tm = 512
        n_pad = ((N + tm - 1) // tm) * tm
        x2 = jnp.pad(x2, ((0, n_pad - N), (0, 0)))  # padded rows masked in stats
    else:
        n_pad = N

    out2 = _tiled_forward(x2, w_p, b_comb, N, n_pad, d_in_p, d_out, tm, out_dtype)
    if n_pad != N:
        # TODO(synk): this slice is an extra copy of the output for awkward N;
        # avoid by choosing B*T divisible by 256 upstream.
        out2 = out2[:N]
    return out2.reshape(B, T, d_out)


# ----------------------------------------------------------------------------
# Reference + init
# ----------------------------------------------------------------------------
def _reference_forward(x, w_lda_t, b_lda, w_k_t, b_k):
    """Pure-JAX f32 reference mirroring the PyTorch forward (train-mode BN, no dropout)."""
    mfccs = x[:, :, :MFCC_DIM]
    ivectors = x[:, :, -IVEC_DIM:]
    ctx_first = jnp.concatenate([mfccs[:, :1, :], mfccs[:, :-1, :]], axis=1)
    ctx_last = jnp.concatenate([mfccs[:, 1:, :], mfccs[:, -1:, :]], axis=1)
    h = jnp.concatenate([ctx_first, mfccs, ctx_last, ivectors], axis=2)
    h = h @ w_lda_t + b_lda
    h = h @ w_k_t + b_k
    h = jnp.maximum(h, 0.0)
    mean = jnp.mean(h, axis=(0, 1), keepdims=True)
    var = jnp.mean((h - mean) ** 2, axis=(0, 1), keepdims=True)
    return (h - mean) * jax.lax.rsqrt(var + BN_EPS)


def init_params(key):
    """Deterministic PyTorch-style (uniform +-1/sqrt(fan_in)) initialization."""
    k1, k2, k3, k4 = jax.random.split(key, 4)
    lim = 1.0 / jnp.sqrt(jnp.float32(IN_DIM))
    # Stored pre-transposed: (in_features, out_features)
    w_lda_t = jax.random.uniform(k1, (IN_DIM, IN_DIM), jnp.float32, -lim, lim)
    b_lda = jax.random.uniform(k2, (IN_DIM,), jnp.float32, -lim, lim)
    w_k_t = jax.random.uniform(k3, (IN_DIM, OUT_DIM), jnp.float32, -lim, lim)
    b_k = jax.random.uniform(k4, (OUT_DIM,), jnp.float32, -lim, lim)
    return w_lda_t, b_lda, w_k_t, b_k


if __name__ == "__main__":
    key = jax.random.PRNGKey(0)
    kp, kx1, kx2, kx3 = jax.random.split(key, 4)
    w_lda_t, b_lda, w_k_t, b_k = init_params(kp)

    # One-time parameter prep (folded + padded + cast) -- hoisted out of forward.
    w_f32, b_comb = prepare_params(w_lda_t, b_lda, w_k_t, b_k, compute_dtype=jnp.float32)
    w_bf16, _ = prepare_params(w_lda_t, b_lda, w_k_t, b_k, compute_dtype=jnp.bfloat16)

    fwd = jax.jit(input_layer_forward, static_argnames=("out_dtype",))
    F = 140  # first 40 feats = MFCC, last 100 = ivector

    # --- Test A: tiny N -> fused single-pass path ---
    B, T = 2, 8
    x = jax.random.normal(kx1, (B, T, F), dtype=jnp.float32)
    ref = jax.block_until_ready(_reference_forward(x, w_lda_t, b_lda, w_k_t, b_k))

    out = jax.block_until_ready(fwd(x, w_f32, b_comb))
    assert out.shape == (B, T, OUT_DIM), out.shape
    assert jnp.allclose(out, ref, atol=2e-3, rtol=2e-3), \
        float(jnp.max(jnp.abs(out - ref)))

    out_bf = jax.block_until_ready(fwd(x, w_bf16, b_comb))
    assert jnp.allclose(out_bf, ref, atol=5e-2, rtol=5e-2), \
        float(jnp.max(jnp.abs(out_bf - ref)))

    # --- Test B: large N (3072) -> stats + recompute two-pass tiled path (tm=1024) ---
    B2, T2 = 2, 1536
    xb = jax.random.normal(kx2, (B2, T2, F), dtype=jnp.float32)
    refb = jax.block_until_ready(_reference_forward(xb, w_lda_t, b_lda, w_k_t, b_k))
    outb = jax.block_until_ready(fwd(xb, w_f32, b_comb))
    assert outb.shape == (B2, T2, OUT_DIM), outb.shape
    assert jnp.allclose(outb, refb, atol=5e-3, rtol=5e-3), \
        float(jnp.max(jnp.abs(outb - refb)))

    # bf16 compute + bf16 output (memory-optimal configuration).
    outb_bf = jax.block_until_ready(fwd(xb, w_bf16, b_comb, out_dtype=jnp.bfloat16))
    assert outb_bf.dtype == jnp.bfloat16
    assert jnp.allclose(outb_bf.astype(jnp.float32), refb, atol=5e-2, rtol=5e-2), \
        float(jnp.max(jnp.abs(outb_bf.astype(jnp.float32) - refb)))

    # --- Test C: awkward N (2100) -> padded + row-masked tiled path ---
    B3, T3 = 3, 700
    xc = jax.random.normal(kx3, (B3, T3, F), dtype=jnp.float32)
    refc = jax.block_until_ready(_reference_forward(xc, w_lda_t, b_lda, w_k_t, b_k))
    outc = jax.block_until_ready(fwd(xc, w_f32, b_comb))
    assert outc.shape == (B3, T3, OUT_DIM), outc.shape
    assert jnp.allclose(outc, refc, atol=5e-3, rtol=5e-3), \
        float(jnp.max(jnp.abs(outc - refc)))

    print("KERNEL_OK")
</pallas_src>

<mosaic_0001>
module attributes {stable_mosaic.version = 11 : i64} {
  func.func @_fused_kernel(%arg0: i32, %arg1: memref<16x256xf32, #tpu.memory_space<vmem>>, %arg2: memref<256x256xf32, #tpu.memory_space<vmem>>, %arg3: memref<1x256xf32, #tpu.memory_space<vmem>>, %arg4: memref<16x256xf32, #tpu.memory_space<vmem>>) attributes {dimension_semantics = [#tpu.dimension_semantics<parallel>], iteration_bounds = array<i64: 6>, scalar_prefetch = 0 : i64, scratch_operands = 0 : i64, tpu.core_type = #tpu.core_type<tc>, window_params = [{pipeline_mode = #tpu.pipeline_mode<synchronous>, transform_indices = @transform_0, window_bounds = array<i64: 16, 256>}, {transform_indices = @transform_1, window_bounds = array<i64: 256, 256>}, {transform_indices = @transform_2, window_bounds = array<i64: 1, 256>}, {transform_indices = @transform_3, window_bounds = array<i64: 16, 256>}]} {
    %c0 = arith.constant 0 : index
    %c0_0 = arith.constant 0 : index
    %0 = vector.load %arg1[%c0, %c0_0] : memref<16x256xf32, #tpu.memory_space<vmem>>, vector<16x256xf32>
    %c0_1 = arith.constant 0 : index
    %c0_2 = arith.constant 0 : index
    %1 = vector.load %arg2[%c0_1, %c0_2] : memref<256x256xf32, #tpu.memory_space<vmem>>, vector<256x256xf32>
    %cst = arith.constant dense<0.000000e+00> : vector<16x256xf32>
    %2 = tpu.matmul %0, %1, %cst {dimension_numbers = #tpu.dot_dimension_numbers<[1], [0], [0], [1], [0, 0, 1, 1], [], []>} : vector<16x256xf32>, vector<256x256xf32>, vector<16x256xf32> -> vector<16x256xf32>
    %c0_3 = arith.constant 0 : index
    %c0_4 = arith.constant 0 : index
    %3 = vector.load %arg3[%c0_3, %c0_4] : memref<1x256xf32, #tpu.memory_space<vmem>>, vector<1x256xf32>
    %4 = vector.broadcast %3 : vector<1x256xf32> to vector<16x256xf32>
    %5 = arith.addf %2, %4 : vector<16x256xf32>
    %cst_5 = arith.constant 0.000000e+00 : f32
    %6 = vector.broadcast %cst_5 : f32 to vector<16x256xf32>
    %7 = arith.maximumf %5, %6 : vector<16x256xf32>
    %cst_6 = arith.constant dense<0.000000e+00> : vector<256xf32>
    %8 = vector.multi_reduction <add>, %7, %cst_6 [0] : vector<16x256xf32> to vector<256xf32>
    %9 = vector.shape_cast %8 : vector<256xf32> to vector<1x256xf32>
    %10 = arith.mulf %7, %7 : vector<16x256xf32>
    %cst_7 = arith.constant dense<0.000000e+00> : vector<256xf32>
    %11 = vector.multi_reduction <add>, %10, %cst_7 [0] : vector<16x256xf32> to vector<256xf32>
    %12 = vector.shape_cast %11 : vector<256xf32> to vector<1x256xf32>
    %cst_8 = arith.constant 6.250000e-02 : f32
    %13 = vector.broadcast %cst_8 : f32 to vector<1x256xf32>
    %14 = arith.mulf %9, %13 : vector<1x256xf32>
    %cst_9 = arith.constant 6.250000e-02 : f32
    %15 = vector.broadcast %cst_9 : f32 to vector<1x256xf32>
    %16 = arith.mulf %12, %15 : vector<1x256xf32>
    %17 = arith.mulf %14, %14 : vector<1x256xf32>
    %18 = arith.subf %16, %17 : vector<1x256xf32>
    %cst_10 = arith.constant 0.000000e+00 : f32
    %19 = vector.broadcast %cst_10 : f32 to vector<1x256xf32>
    %20 = arith.maximumf %18, %19 : vector<1x256xf32>
    %21 = vector.broadcast %14 : vector<1x256xf32> to vector<16x256xf32>
    %22 = arith.subf %7, %21 : vector<16x256xf32>
    %cst_11 = arith.constant 1.000000e-03 : f32
    %23 = vector.broadcast %cst_11 : f32 to vector<1x256xf32>
    %24 = arith.addf %20, %23 : vector<1x256xf32>
    %25 = math.rsqrt %24 : vector<1x256xf32>
    %26 = vector.broadcast %25 : vector<1x256xf32> to vector<16x256xf32>
    %27 = arith.mulf %22, %26 : vector<16x256xf32>
    %c0_12 = arith.constant 0 : index
    %c0_13 = arith.constant 0 : index
    %28 = vector.load %arg4[%c0_12, %c0_13] : memref<16x256xf32, #tpu.memory_space<vmem>>, vector<16x256xf32>
    tpu.vector_store %arg4[%c0_12, %c0_13], %27 {strides = array<i32>} : memref<16x256xf32, #tpu.memory_space<vmem>>, vector<16x256xf32>,
    return
  }
  func.func @transform_0(%arg0: i32) -> (i32, i32) {
    %c0_i32 = arith.constant 0 : i32
    %c0_i32_0 = arith.constant 0 : i32
    %c0_i32_1 = arith.constant 0 : i32
    return %c0_i32, %c0_i32_0 : i32, i32
  }
  func.func @transform_1(%arg0: i32) -> (i32, i32) {
    %c0_i32 = arith.constant 0 : i32
    %c0_i32_0 = arith.constant 0 : i32
    return %c0_i32, %arg0 : i32, i32
  }
  func.func @transform_2(%arg0: i32) -> (i32, i32) {
    %c0_i32 = arith.constant 0 : i32
    %c0_i32_0 = arith.constant 0 : i32
    return %c0_i32, %arg0 : i32, i32
  }
  func.func @transform_3(%arg0: i32) -> (i32, i32) {
    %c0_i32 = arith.constant 0 : i32
    %c0_i32_0 = arith.constant 0 : i32
    return %c0_i32, %arg0 : i32, i32
  }
}

</mosaic_0001>

<llo_original>
// kernel: input_layer_forward.1
$region0: #{input_layer_forward.1}
  #allocation0 [shape = 'u32[]', space=smem, size = 0x4, offset = 0x4, fixed_abs, tag = 'smem constant byte address 0x4 - core index']
  #allocation1 [shape = 'u32[144,128]{1,0:T(1,128)}', space=vmem, size = 0x12000, scoped, tag = 'internal scratch']
  %s0 = inlined_call_operand.vmem [shape: f32[16,256], index: 0, kind: input, shape index: {}]
  %s1 = inlined_call_operand.hbm [shape: f32[256,1536], index: 1, kind: input, shape index: {}]
  %s2 = inlined_call_operand.hbm [shape: f32[1,1536], index: 2, kind: input, shape index: {}]
  %s3 = inlined_call_operand.hbm [shape: f32[16,1536], index: 3, kind: output, shape index: {}]
  %s4 = sld [smem:[#allocation0]]
  $region53: #{input_layer_forward.1} parent=0
    _
  %s6 = ssub.s32 1, %s4
  %s7 = scalar_select 0, %s6, %s4
  $region1: #{input_layer_forward.1} parent=0
    #allocation2 [shape = 'u8[524288]{0}', space=vmem, size = 0x80000, scoped, tag = 'input window, operand 1']
    #allocation3 [shape = 's32[2]{0}', space=sflag, size = 0x8, scoped, tag = 'scoped memory for input_layer_forward.1']
    #allocation4 [shape = 's32[2]{0}', space=sflag, size = 0x8, scoped, tag = 'scoped memory for input_layer_forward.1']
    #allocation5 [shape = 'u8[2048]{0}', space=vmem, size = 0x800, scoped, tag = 'input window, operand 2']
    #allocation6 [shape = 's32[2]{0}', space=sflag, size = 0x8, scoped, tag = 'scoped memory for input_layer_forward.1']
    #allocation7 [shape = 'u8[32768]{0}', space=vmem, size = 0x8000, scoped, tag = 'output window, operand 0']
    %8 = vsyncpa [#allocation3], 0
    %s9 = scalar_lea.sflag [#allocation3], 1
    %10 = vsyncpa %s9, 0
    %11 = vsyncpa [#allocation6], 0
    %s12 = scalar_lea.sflag [#allocation6], 1
    %13 = vsyncpa %s12, 0
    %14 = vsyncpa [#allocation4], 0
    %s15 = scalar_lea.sflag [#allocation4], 1
    %16 = vsyncpa %s15, 0
    loop: start=0, step=1, limit=8
    $region2: #{input_layer_forward.1} parent=1 // loop_pre_header
      _
    $region3: #{input_layer_forward.1} parent=1 // loop_header
      %s18 = sphi 0, %s22
      %p19 = scmp.ge.s32.totalorder %s18, 8
      %s26 = sphi 0, %s26
      %s28 = sphi 0, %s26
      %s29 = sphi 0, %s28
      %s43 = sphi 0, %s29
      %s49 = sphi 0, %s51
      %s52 = sphi 0, %s49
      %s53 = sphi 0, %s52
      %s69 = sphi 0, %s53
      %s75 = sphi 0, %s77
      %s78 = sphi 0, %s75
      %s79 = sphi 0, %s78
      %s95 = sphi 0, %s79
      %s101 = sphi 0, %s103
      %s104 = sphi 0, %s101
      %s105 = sphi 0, %s104
      %s121 = sphi 0, %s105
    $region4: #{input_layer_forward.1} parent=1 // loop_header_branch
      %21 = sbr.rel (%p19) target = $region8
    $region5: #{input_layer_forward.1} parent=1 // loop_body
      %s23 = ssub.s32 %s18, 1
      %s24 = ssub.s32 %s18, 2
      %s25 = sadd.s32 %s18, 1
      %s27 = sadd.s32 %s26, 1
      %p30 = scmp.eq.s32.totalorder %s18, 5
      %p31 = scmp.ne.s32.totalorder %s26, %s28
      %p32 = scmp.eq.s32.totalorder %s18, 0
      %p33 = por %p31, %p32
      %p34 = scmp.ne.s32.totalorder %s26, %s28
      %p35 = scmp.eq.s32.totalorder %s23, 5
      %p36 = por %p34, %p35
      %p37 = scmp.ne.s32.totalorder %s28, %s29
      %p38 = scmp.eq.s32.totalorder %s23, 0
      %p39 = por %p37, %p38
      %p40 = scmp.ne.s32.totalorder %s28, %s29
      %p41 = scmp.eq.s32.totalorder %s24, 5
      %p42 = por %p40, %p41
      %p44 = scmp.ne.s32.totalorder %s29, %s43
      %p45 = scmp.eq.s32.totalorder %s24, 0
      %p46 = por %p44, %p45
      %s47 = ssub.s32 %s18, %s25
      %p48 = scmp.eq.s32.totalorder %s47, 0
      %s50 = sadd.s32 %s49, 1
      %s51 = scalar_select %p48, %s49, %s50
      %p54 = pneg %p48
      %p55 = scmp.eq.s32.totalorder %s18, 5
      %p56 = por %p54, %p55
      %p57 = scmp.ne.s32.totalorder %s49, %s52
      %p58 = scmp.eq.s32.totalorder %s18, 0
      %p59 = por %p57, %p58
      %p60 = scmp.ne.s32.totalorder %s49, %s52
      %p61 = scmp.eq.s32.totalorder %s23, 5
      %p62 = por %p60, %p61
      %p63 = scmp.ne.s32.totalorder %s52, %s53
      %p64 = scmp.eq.s32.totalorder %s23, 0
      %p65 = por %p63, %p64
      %p66 = scmp.ne.s32.totalorder %s52, %s53
      %p67 = scmp.eq.s32.totalorder %s24, 5
      %p68 = por %p66, %p67
      %p70 = scmp.ne.s32.totalorder %s53, %s69
      %p71 = scmp.eq.s32.totalorder %s24, 0
      %p72 = por %p70, %p71
      %s73 = ssub.s32 %s18, %s25
      %p74 = scmp.eq.s32.totalorder %s73, 0
      %s76 = sadd.s32 %s75, 1
      %s77 = scalar_select %p74, %s75, %s76
      %p80 = pneg %p74
      %p81 = scmp.eq.s32.totalorder %s18, 5
      %p82 = por %p80, %p81
      %p83 = scmp.ne.s32.totalorder %s75, %s78
      %p84 = scmp.eq.s32.totalorder %s18, 0
      %p85 = por %p83, %p84
      %p86 = scmp.ne.s32.totalorder %s75, %s78
      %p87 = scmp.eq.s32.totalorder %s23, 5
      %p88 = por %p86, %p87
      %p89 = scmp.ne.s32.totalorder %s78, %s79
      %p90 = scmp.eq.s32.totalorder %s23, 0
      %p91 = por %p89, %p90
      %p92 = scmp.ne.s32.totalorder %s78, %s79
      %p93 = scmp.eq.s32.totalorder %s24, 5
      %p94 = por %p92, %p93
      %p96 = scmp.ne.s32.totalorder %s79, %s95
      %p97 = scmp.eq.s32.totalorder %s24, 0
      %p98 = por %p96, %p97
      %s99 = ssub.s32 %s18, %s25
      %p100 = scmp.eq.s32.totalorder %s99, 0
      %s102 = sadd.s32 %s101, 1
      %s103 = scalar_select %p100, %s101, %s102
      %p106 = pneg %p100
      %p107 = scmp.eq.s32.totalorder %s18, 5
      %p108 = por %p106, %p107
      %p109 = scmp.ne.s32.totalorder %s101, %s104
      %p110 = scmp.eq.s32.totalorder %s18, 0
      %p111 = por %p109, %p110
      %p112 = scmp.ne.s32.totalorder %s101, %s104
      %p113 = scmp.eq.s32.totalorder %s23, 5
      %p114 = por %p112, %p113
      %p115 = scmp.ne.s32.totalorder %s104, %s105
      %p116 = scmp.eq.s32.totalorder %s23, 0
      %p117 = por %p115, %p116
      %p118 = scmp.ne.s32.totalorder %s104, %s105
      %p119 = scmp.eq.s32.totalorder %s24, 5
      %p120 = por %p118, %p119
      %p122 = scmp.ne.s32.totalorder %s105, %s121
      %p123 = scmp.eq.s32.totalorder %s24, 0
      %p124 = por %p122, %p123
      %p125 = scmp.le.s32.totalorder 1, %s18
      %p126 = scmp.lt.s32.totalorder %s18, 7
      %p127 = pnand %p125, %p126
      %p128 = pneg %p127
      // Predicated region
      $region9: #{input_layer_forward.1} parent=5 // pred_check
        _
      $region10: #{input_layer_forward.1} parent=5 // pred_check_branch
        %130 = sbr.rel (%p127) target = $region12
      $region11: #{input_layer_forward.1} parent=5 // pred_region
        %s131 = ssub.s32 %s18, 1
        // Predicated region
        $region13: #{input_layer_forward.1} parent=11 // pred_check
          %p132 = pneg %p39
        $region14: #{input_layer_forward.1} parent=11 // pred_check_branch
          %134 = sbr.rel (%p132) target = $region16
        $region15: #{input_layer_forward.1} parent=11 // pred_region
          _
        $region16: #{input_layer_forward.1} parent=11 // pred_fallthru
          _
      $region12: #{input_layer_forward.1} parent=5 // pred_fallthru
        _
      %p135 = scmp.lt.s32.totalorder %s18, 6
      // Predicated region
      $region17: #{input_layer_forward.1} parent=5 // pred_check
        %p136 = pneg %p135
      $region18: #{input_layer_forward.1} parent=5 // pred_check_branch
        %138 = sbr.rel (%p136) target = $region20
      $region19: #{input_layer_forward.1} parent=5 // pred_region
        // Predicated region
        $region21: #{input_layer_forward.1} parent=19 // pred_check
          %p139 = pneg %p59
        $region22: #{input_layer_forward.1} parent=19 // pred_check_branch
          %141 = sbr.rel (%p139) target = $region24
        $region23: #{input_layer_forward.1} parent=19 // pred_region
          %s142 = sand.u32 %s49, 1
          %s143 = scalar_lea.sflag [#allocation3], %s142
          %s144 = sand.u32 %s49, 1
          %s145 = smul.addr %s144, 512
          %s146 = scalar_lea.vmem [#allocation2], %s145
          %s147 = smul.u32 2, %s18
          %s149 = ssub.s32 8192, 8192
          %150 = vsyncadd %s143, %s149
          %s151 = smul.addr %s147, 128
          %s152 = scalar_lea.hbm %s1, %s151
          %s153 = sshll.u32 %s146, 4
          %s154 = int_to_ptr.vmem [resolvable:$true] %s153
          %159 = dma.hbm_to_vmem [thread:$0]  %s152, 8192, %s154, %s143, 1536, 256, 16
        $region24: #{input_layer_forward.1} parent=19 // pred_fallthru
          _
        // Predicated region
        $region25: #{input_layer_forward.1} parent=19 // pred_check
          %p160 = pneg %p85
        $region26: #{input_layer_forward.1} parent=19 // pred_check_branch
          %162 = sbr.rel (%p160) target = $region28
        $region27: #{input_layer_forward.1} parent=19 // pred_region
          %s163 = sand.u32 %s75, 1
          %s164 = scalar_lea.sflag [#allocation6], %s163
          %s165 = sand.u32 %s75, 1
          %s166 = smul.addr %s165, 2
          %s167 = scalar_lea.vmem [#allocation5], %s166
          %s168 = smul.u32 2, %s18
          %s170 = ssub.s32 32, 32
          %171 = vsyncadd %s164, %s170
          %s172 = smul.addr %s168, 16
          %s173 = scalar_lea.hbm %s2, %s172
          %s175 = sshll.u32 %s167, 4
          %s176 = int_to_ptr.vmem [resolvable:$true] %s175
          %178 = dma.hbm_to_vmem [thread:$0]  %s173, 32, %s176, %s164
        $region28: #{input_layer_forward.1} parent=19 // pred_fallthru
          _
      $region20: #{input_layer_forward.1} parent=5 // pred_fallthru
        _
      %p179 = scmp.le.s32.totalorder 1, %s18
      %p180 = scmp.lt.s32.totalorder %s18, 7
      %p181 = pnand %p179, %p180
      %p182 = pneg %p181
      // Predicated region
      $region29: #{input_layer_forward.1} parent=5 // pred_check
        _
      $region30: #{input_layer_forward.1} parent=5 // pred_check_branch
        %184 = sbr.rel (%p181) target = $region32
      $region31: #{input_layer_forward.1} parent=5 // pred_region
        %s185 = ssub.s32 %s18, 1
        %s186 = sand.u32 %s52, 1
        %s187 = scalar_lea.sflag [#allocation3], %s186
        %s188 = sand.u32 %s52, 1
        %s189 = smul.addr %s188, 512
        %s190 = scalar_lea.vmem [#allocation2], %s189
        // Predicated region
        $region33: #{input_layer_forward.1} parent=31 // pred_check
          %p191 = pneg %p65
        $region34: #{input_layer_forward.1} parent=31 // pred_check_branch
          %193 = sbr.rel (%p191) target = $region36
        $region35: #{input_layer_forward.1} parent=31 // pred_region
          %194 = dma.done %s187, 8192
        $region36: #{input_layer_forward.1} parent=31 // pred_fallthru
          _
        %s195 = sand.u32 %s78, 1
        %s196 = scalar_lea.sflag [#allocation6], %s195
        %s197 = sand.u32 %s78, 1
        %s198 = smul.addr %s197, 2
        %s199 = scalar_lea.vmem [#allocation5], %s198
        // Predicated region
        $region37: #{input_layer_forward.1} parent=31 // pred_check
          %p200 = pneg %p91
        $region38: #{input_layer_forward.1} parent=31 // pred_check_branch
          %202 = sbr.rel (%p200) target = $region40
        $region39: #{input_layer_forward.1} parent=31 // pred_region
          %203 = dma.done %s196, 32
        $region40: #{input_layer_forward.1} parent=31 // pred_fallthru
          _
        %p204 = pneg %p39
        %p205 = pneg %p36
        %s206 = sand.u32 %s52, 1
        %s207 = scalar_lea.sflag [#allocation3], %s206
        %s208 = sand.u32 %s52, 1
        %s209 = smul.addr %s208, 512
        %s210 = scalar_lea.vmem [#allocation2], %s209
        %p211 = pneg %p65
        %p212 = pneg %p62
        %s213 = sand.u32 %s78, 1
        %s214 = scalar_lea.sflag [#allocation6], %s213
        %s215 = sand.u32 %s78, 1
        %s216 = smul.addr %s215, 2
        %s217 = scalar_lea.vmem [#allocation5], %s216
        %p218 = pneg %p91
        %p219 = pneg %p88
        %p220 = pneg %p117
        %p221 = pneg %p114
        %s222 = sand.u32 %s104, 1
        %s223 = scalar_lea.sflag [#allocation4], %s222
        %s224 = sand.u32 %s104, 1
        %s225 = smul.addr %s224, 32
        %s226 = scalar_lea.vmem [#allocation7], %s225
        %s227 = smul.u32 2, %s23
        %s228 = smul.u32 2, %s23
        %s229 = smul.u32 2, %s23
        %v230 = vld [vmem:[%s0] sm:$0xff]
        %v231 = vld [vmem:[%s0 + $0x8] sm:$0xff]
        %v232 = vld [vmem:[%s0 + $0x10] sm:$0xff]
        %v233 = vld [vmem:[%s0 + $0x18] sm:$0xff]
        %v234 = vld [vmem:[%s190] sm:$0xff]
        %v235 = vld [vmem:[%s190 + $0x8] sm:$0xff]
        %v236 = vld [vmem:[%s190 + $0x10] sm:$0xff]
        %v237 = vld [vmem:[%s190 + $0x18] sm:$0xff]
        %v238 = vld [vmem:[%s190 + $0x20] sm:$0xff]
        %v239 = vld [vmem:[%s190 + $0x28] sm:$0xff]
        %v240 = vld [vmem:[%s190 + $0x30] sm:$0xff]
        %v241 = vld [vmem:[%s190 + $0x38] sm:$0xff]
        %v242 = vld [vmem:[%s190 + $0x40] sm:$0xff]
        %v243 = vld [vmem:[%s190 + $0x48] sm:$0xff]
        %v244 = vld [vmem:[%s190 + $0x50] sm:$0xff]
        %v245 = vld [vmem:[%s190 + $0x58] sm:$0xff]
        %v246 = vld [vmem:[%s190 + $0x60] sm:$0xff]
        %v247 = vld [vmem:[%s190 + $0x68] sm:$0xff]
        %v248 = vld [vmem:[%s190 + $0x70] sm:$0xff]
        %v249 = vld [vmem:[%s190 + $0x78] sm:$0xff]
        %v250 = vld [vmem:[%s190 + $0x80] sm:$0xff]
        %v251 = vld [vmem:[%s190 + $0x88] sm:$0xff]
        %v252 = vld [vmem:[%s190 + $0x90] sm:$0xff]
        %v253 = vld [vmem:[%s190 + $0x98] sm:$0xff]
        %v254 = vld [vmem:[%s190 + $0xa0] sm:$0xff]
        %v255 = vld [vmem:[%s190 + $0xa8] sm:$0xff]
        %v256 = vld [vmem:[%s190 + $0xb0] sm:$0xff]
        %v257 = vld [vmem:[%s190 + $0xb8] sm:$0xff]
        %v258 = vld [vmem:[%s190 + $0xc0] sm:$0xff]
        %v259 = vld [vmem:[%s190 + $0xc8] sm:$0xff]
        %v260 = vld [vmem:[%s190 + $0xd0] sm:$0xff]
        %v261 = vld [vmem:[%s190 + $0xd8] sm:$0xff]
        %v262 = vld [vmem:[%s190 + $0xe0] sm:$0xff]
        %v263 = vld [vmem:[%s190 + $0xe8] sm:$0xff]
        %v264 = vld [vmem:[%s190 + $0xf0] sm:$0xff]
        %v265 = vld [vmem:[%s190 + $0xf8] sm:$0xff]
        %v266 = vld [vmem:[%s190 + $0x100] sm:$0xff]
        %v267 = vld [vmem:[%s190 + $0x108] sm:$0xff]
        %v268 = vld [vmem:[%s190 + $0x110] sm:$0xff]
        %v269 = vld [vmem:[%s190 + $0x118] sm:$0xff]
        %v270 = vld [vmem:[%s190 + $0x120] sm:$0xff]
        %v271 = vld [vmem:[%s190 + $0x128] sm:$0xff]
        %v272 = vld [vmem:[%s190 + $0x130] sm:$0xff]
        %v273 = vld [vmem:[%s190 + $0x138] sm:$0xff]
        %v274 = vld [vmem:[%s190 + $0x140] sm:$0xff]
        %v275 = vld [vmem:[%s190 + $0x148] sm:$0xff]
        %v276 = vld [vmem:[%s190 + $0x150] sm:$0xff]
        %v277 = vld [vmem:[%s190 + $0x158] sm:$0xff]
        %v278 = vld [vmem:[%s190 + $0x160] sm:$0xff]
        %v279 = vld [vmem:[%s190 + $0x168] sm:$0xff]
        %v280 = vld [vmem:[%s190 + $0x170] sm:$0xff]
        %v281 = vld [vmem:[%s190 + $0x178] sm:$0xff]
        %v282 = vld [vmem:[%s190 + $0x180] sm:$0xff]
        %v283 = vld [vmem:[%s190 + $0x188] sm:$0xff]
        %v284 = vld [vmem:[%s190 + $0x190] sm:$0xff]
        %v285 = vld [vmem:[%s190 + $0x198] sm:$0xff]
        %v286 = vld [vmem:[%s190 + $0x1a0] sm:$0xff]
        %v287 = vld [vmem:[%s190 + $0x1a8] sm:$0xff]
        %v288 = vld [vmem:[%s190 + $0x1b0] sm:$0xff]
        %v289 = vld [vmem:[%s190 + $0x1b8] sm:$0xff]
        %v290 = vld [vmem:[%s190 + $0x1c0] sm:$0xff]
        %v291 = vld [vmem:[%s190 + $0x1c8] sm:$0xff]
        %v292 = vld [vmem:[%s190 + $0x1d0] sm:$0xff]
        %v293 = vld [vmem:[%s190 + $0x1d8] sm:$0xff]
        %v294 = vld [vmem:[%s190 + $0x1e0] sm:$0xff]
        %v295 = vld [vmem:[%s190 + $0x1e8] sm:$0xff]
        %v296 = vld [vmem:[%s190 + $0x1f0] sm:$0xff]
        %v297 = vld [vmem:[%s190 + $0x1f8] sm:$0xff]
        %v298 = vld [vmem:[%s199] sm:$0x3]
        %v300 = vlaneseq
        %v301 = vshrl.u32 %v300, 7
        %v302 = vsub.s32 0, %v301
        %v303 = vrot.slane %v298, %v302
        %v304 = vlaneseq
        %v305 = vshrl.u32 %v304, 7
        %v306 = vsub.s32 1, %v305
        %v307 = vrot.slane %v298, %v306
        %310 = vmatprep.subr.mxu0 %v235
        %311 = vmatpush1.msra.mxu0 %v234
        %312 = vmatprep.subr.mxu0 %v237
        %313 = vmatpush1.msra.mxu0 %v236
        %314 = vmatprep.subr.mxu0 %v239
        %315 = vmatpush1.msra.mxu0 %v238
        %316 = vmatprep.subr.mxu0 %v241
        %317 = vmatpush1.msra.mxu0 %v240
        %318 = vmatprep.subr.mxu0 %v243
        %319 = vmatpush1.msra.mxu0 %v242
        %320 = vmatprep.subr.mxu0 %v245
        %321 = vmatpush1.msra.mxu0 %v244
        %322 = vmatprep.subr.mxu0 %v247
        %323 = vmatpush1.msra.mxu0 %v246
        %324 = vmatprep.subr.mxu0 %v249
        %325 = vmatpush1.msra.mxu0 %v248
        %326 = vmatprep.subr.mxu0 %v251
        %327 = vmatpush1.msra.mxu0 %v250
        %328 = vmatprep.subr.mxu0 %v253
        %329 = vmatpush1.msra.mxu0 %v252
        %330 = vmatprep.subr.mxu0 %v255
        %331 = vmatpush1.msra.mxu0 %v254
        %332 = vmatprep.subr.mxu0 %v257
        %333 = vmatpush1.msra.mxu0 %v256
        %334 = vmatprep.subr.mxu0 %v259
        %335 = vmatpush1.msra.mxu0 %v258
        %336 = vmatprep.subr.mxu0 %v261
        %337 = vmatpush1.msra.mxu0 %v260
        %338 = vmatprep.subr.mxu0 %v263
        %339 = vmatpush1.msra.mxu0 %v262
        %340 = vmatprep.subr.mxu0 %v265
        %341 = vmatpush1.msra.mxu0 %v264
        %342 = vmatprep.subr.mxu0 %v267
        %343 = vmatpush1.msra.mxu0 %v266
        %344 = vmatprep.subr.mxu0 %v269
        %345 = vmatpush1.msra.mxu0 %v268
        %346 = vmatprep.subr.mxu0 %v271
        %347 = vmatpush1.msra.mxu0 %v270
        %348 = vmatprep.subr.mxu0 %v273
        %349 = vmatpush1.msra.mxu0 %v272
        %350 = vmatprep.subr.mxu0 %v275
        %351 = vmatpush1.msra.mxu0 %v274
        %352 = vmatprep.subr.mxu0 %v277
        %353 = vmatpush1.msra.mxu0 %v276
        %354 = vmatprep.subr.mxu0 %v279
        %355 = vmatpush1.msra.mxu0 %v278
        %356 = vmatprep.subr.mxu0 %v281
        %357 = vmatpush1.msra.mxu0 %v280
        %358 = vmatprep.subr.mxu0 %v283
        %359 = vmatpush1.msra.mxu0 %v282
        %360 = vmatprep.subr.mxu0 %v285
        %361 = vmatpush1.msra.mxu0 %v284
        %362 = vmatprep.subr.mxu0 %v287
        %363 = vmatpush1.msra.mxu0 %v286
        %364 = vmatprep.subr.mxu0 %v289
        %365 = vmatpush1.msra.mxu0 %v288
        %366 = vmatprep.subr.mxu0 %v291
        %367 = vmatpush1.msra.mxu0 %v290
        %368 = vmatprep.subr.mxu0 %v293
        %369 = vmatpush1.msra.mxu0 %v292
        %370 = vmatprep.subr.mxu0 %v295
        %371 = vmatpush1.msra.mxu0 %v294
        %372 = vmatprep.subr.mxu0 %v297
        %373 = vmatpush1.msra.mxu0 %v296
        %374 = vmatprep.mubr.f32.mxu0 %v231
        %375 = vmatmul.mubr.f32.gmra.mrb[0].mxu0 %v230
        %v376 = vpop.f32.mrb[0].mxu0
        %v377 = vadd.f32 %v303, %v376
        %v378 = vpop.f32.mrb[0].mxu0
        %v379 = vadd.f32 %v307, %v378
        %380 = vmatprep.mubr.f32.mxu0 %v233
        %381 = vmatmul.mubr.f32.gmra.mrb[0].mxu0 %v232
        %v382 = vpop.f32.mrb[0].mxu0
        %v383 = vadd.f32 %v303, %v382
        %v384 = vpop.f32.mrb[0].mxu0
        %v385 = vadd.f32 %v307, %v384
        %386 = vdwg.mxu0
        %v387 = vmax.f32 %v377, 0.0
        %v388 = vmax.f32 %v379, 0.0
        %v389 = vmax.f32 %v383, 0.0
        %v390 = vmax.f32 %v385, 0.0
        %v391 = vadd.f32 %v387, %v389
        %v392 = vrot.slane %v391, 4
        %v393 = vadd.f32 %v391, %v392
        %v394 = vrot.slane %v393, 2
        %v395 = vadd.f32 %v393, %v394
        %v396 = vrot.slane %v395, 1
        %v397 = vadd.f32 %v395, %v396
        %v398 = vadd.f32 %v388, %v390
        %v399 = vrot.slane %v398, 4
        %v400 = vadd.f32 %v398, %v399
        %v401 = vrot.slane %v400, 2
        %v402 = vadd.f32 %v400, %v401
        %v403 = vrot.slane %v402, 1
        %v404 = vadd.f32 %v402, %v403
        %v405 = vmul.f32 %v387, %v387
        %v406 = vmul.f32 %v388, %v388
        %v407 = vmul.f32 %v389, %v389
        %v408 = vmul.f32 %v390, %v390
        %v409 = vadd.f32 %v405, %v407
        %v410 = vrot.slane %v409, 4
        %v411 = vadd.f32 %v409, %v410
        %v412 = vrot.slane %v411, 2
        %v413 = vadd.f32 %v411, %v412
        %v414 = vrot.slane %v413, 1
        %v415 = vadd.f32 %v413, %v414
        %v416 = vadd.f32 %v406, %v408
        %v417 = vrot.slane %v416, 4
        %v418 = vadd.f32 %v416, %v417
        %v419 = vrot.slane %v418, 2
        %v420 = vadd.f32 %v418, %v419
        %v421 = vrot.slane %v420, 1
        %v422 = vadd.f32 %v420, %v421
        %v423 = vmul.f32 %v397, 0.0625
        %v424 = vmul.f32 %v404, 0.0625
        %v425 = vmul.f32 %v415, 0.0625
        %v426 = vmul.f32 %v422, 0.0625
        %v427 = vmul.f32 %v423, %v423
        %v428 = vmul.f32 %v424, %v424
        %v429 = vsub.f32 %v425, %v427
        %v430 = vsub.f32 %v426, %v428
        %v431 = vmax.f32 %v429, 0.0
        %v432 = vmax.f32 %v430, 0.0
        %v433 = vsub.f32 %v387, %v423
        %v434 = vsub.f32 %v388, %v424
        %v435 = vsub.f32 %v389, %v423
        %v436 = vsub.f32 %v390, %v424
        %v437 = vadd.f32 %v431, 0.001
        %v438 = vadd.f32 %v432, 0.001
        %v439 = vrsqrt.pop %v437
        %v440 = vrsqrt.pop %v438
        %v441 = vmul.f32 %v433, %v439
        %v442 = vmul.f32 %v434, %v440
        %v443 = vmul.f32 %v435, %v439
        %v444 = vmul.f32 %v436, %v440
        %445 = vst [vmem:[%s226] sm:$0xff] %v441
        %446 = vst [vmem:[%s226 + $0x8] sm:$0xff] %v442
        %447 = vst [vmem:[%s226 + $0x10] sm:$0xff] %v443
        %448 = vst [vmem:[%s226 + $0x18] sm:$0xff] %v444
        %s449 = sand.u32 %s104, 1
        %s450 = scalar_lea.sflag [#allocation4], %s449
        %s451 = sand.u32 %s104, 1
        %s452 = smul.addr %s451, 32
        %s453 = scalar_lea.vmem [#allocation7], %s452
        // Predicated region
        $region41: #{input_layer_forward.1} parent=31 // pred_check
          %p454 = pneg %p114
        $region42: #{input_layer_forward.1} parent=31 // pred_check_branch
          %456 = sbr.rel (%p454) target = $region44
        $region43: #{input_layer_forward.1} parent=31 // pred_region
          %s457 = smul.u32 2, %s23
          %s459 = ssub.s32 512, 512
          %460 = vsyncadd %s450, %s459
          %s461 = smul.addr %s457, 128
          %s462 = scalar_lea.hbm %s3, %s461
          %s463 = sshll.u32 %s453, 4
          %s464 = int_to_ptr.vmem [resolvable:$true] %s463
          %469 = dma.vmem_to_hbm [thread:$0]  %s464, 512, %s462, %s450, 256, 1536, 16
        $region44: #{input_layer_forward.1} parent=31 // pred_fallthru
          _
      $region32: #{input_layer_forward.1} parent=5 // pred_fallthru
        _
      %p470 = scmp.le.s32.totalorder 2, %s18
      // Predicated region
      $region45: #{input_layer_forward.1} parent=5 // pred_check
        %p471 = pneg %p470
      $region46: #{input_layer_forward.1} parent=5 // pred_check_branch
        %473 = sbr.rel (%p471) target = $region48
      $region47: #{input_layer_forward.1} parent=5 // pred_region
        %s474 = ssub.s32 %s18, 2
        // Predicated region
        $region49: #{input_layer_forward.1} parent=47 // pred_check
          %p475 = pneg %p120
        $region50: #{input_layer_forward.1} parent=47 // pred_check_branch
          %477 = sbr.rel (%p475) target = $region52
        $region51: #{input_layer_forward.1} parent=47 // pred_region
          %s478 = sand.u32 %s105, 1
          %s479 = scalar_lea.sflag [#allocation4], %s478
          %s480 = sand.u32 %s105, 1
          %s481 = smul.addr %s480, 32
          %s482 = scalar_lea.vmem [#allocation7], %s481
          %483 = dma.done %s479, 512
        $region52: #{input_layer_forward.1} parent=47 // pred_fallthru
          _
      $region48: #{input_layer_forward.1} parent=5 // pred_fallthru
        _
    $region6: #{input_layer_forward.1} parent=1 // loop_footer
      %s22 = sadd.s32 1, %s18
    $region7: #{input_layer_forward.1} parent=1 // loop_footer_branch
      %17 = sbr.rel target = $region3
    $region8: #{input_layer_forward.1} parent=1 // loop_exit
      _
    %484 = vsyncpa [#allocation3], 1
    %s485 = scalar_lea.sflag [#allocation3], 1
    %486 = vsyncpa %s485, 1
    %487 = vsyncpa [#allocation6], 1
    %s488 = scalar_lea.sflag [#allocation6], 1
    %489 = vsyncpa %s488, 1
    %490 = vsyncpa [#allocation4], 1
    %s491 = scalar_lea.sflag [#allocation4], 1
    %492 = vsyncpa %s491, 1

</llo_original>
